<compile_context>
chip_gen: v7x
topology: tpu7x:2x2x1
jax: 0.10.0
libtpu: 0.0.40
codegen_flags: <defaults>
</compile_context>

<pallas_src>
import jax
import jax.numpy as jnp
from jax.experimental import pallas as pl
from jax.experimental.pallas import tpu as pltpu


def dual_encoder_kernel(sc_ref, clip_ref, dino_ref, pk_ref, out_ref, x2_ref):
    # sc_ref  : SMEM (2,) f32      [clip_weight, dino_weight] (scalar prefetch)
    # clip_ref/dino_ref : VMEM (B, S, D) per-image backbone last_hidden_state
    # pk_ref  : VMEM (2S + D + 8, Cp) packed [pe_proj; pe_proj; W_eff; b_eff]
    # out_ref : VMEM (2S, Cp)      lane-dense padded logits for this image
    # x2_ref  : VMEM (2S, D) f32   scratch for the fused token block
    B, S, D = clip_ref.shape
    S2 = 2 * S

    # .mean(dim=0) over the S2 crops; both halves staged into one tile so the
    # folded linear tail is a single M=2S MXU matmul.
    x2_ref[0:S, :] = jnp.mean(clip_ref[...], axis=0)
    x2_ref[S:S2, :] = jnp.mean(dino_ref[...], axis=0)

    pe2 = pk_ref[0:S2, :]                    # (2S, Cp) = pe @ W_eff (pre-duplicated)
    w_eff = pk_ref[S2:S2 + D, :]             # (D, Cp)  folded v/out/classifier weight
    b_eff = pk_ref[S2 + D:S2 + D + 1, :]     # (1, Cp)  folded bias (single broadcast)

    # Per-row re-weighting column: rows [0, S) -> clip_weight, [S, 2S) -> dino_weight.
    #   sc * (mean(x) + pe) @ W + b == sc_col * (mean(x) @ W + pe @ W) + b   (exact)
    row = jax.lax.broadcasted_iota(jnp.int32, (S2, 1), 0)
    sc_col = jnp.where(row < S, sc_ref[0], sc_ref[1])

    out_ref[...] = (
        sc_col * (jnp.dot(x2_ref[...], w_eff, preferred_element_type=jnp.float32) + pe2)
        + b_eff
    )


def prepare_params(params, S, D, C):
    """Fold the linear tail + PE and pack the tiny tensors (done once, off-kernel)."""
    Cp = pl.cdiv(C, 128) * 128

    # W_eff = W_v @ W_o @ W_lin ; b_eff = (b_v @ W_o + b_o) @ W_lin + b_lin
    w_eff = params["w_v"] @ params["w_o"] @ params["w_lin"]                     # (D, C)
    b_eff = (params["b_v"] @ params["w_o"] + params["b_o"]) @ params["w_lin"] \
        + params["b_lin"]                                                       # (1, C)
    pe_proj = params["pos_emb"] @ w_eff                                         # (S, C)

    R = 2 * S + D + 8                      # rows padded to a multiple of 8
    packed = jnp.zeros((R, Cp), jnp.float32)
    packed = packed.at[0:S, 0:C].set(pe_proj)            # clip-half PE (projected)
    packed = packed.at[S:2 * S, 0:C].set(pe_proj)        # dino-half PE (projected)
    packed = packed.at[2 * S:2 * S + D, 0:C].set(w_eff)  # folded weight
    packed = packed.at[2 * S + D, 0:C].set(b_eff[0])     # folded bias

    scalars = jnp.concatenate(
        [params["clip_weight"].reshape(-1), params["dino_weight"].reshape(-1)]
    ).astype(jnp.float32)                                                       # (2,)
    return scalars, packed


def dual_encoder_forward(clip_feat, dino_feat, scalars, packed, num_classes):
    N, B, S, D = clip_feat.shape
    R, Cp = packed.shape
    S2 = 2 * S

    feat_spec = pl.BlockSpec((None, B, S, D), lambda n, sc: (n, 0, 0, 0))
    grid_spec = pltpu.PrefetchScalarGridSpec(
        num_scalar_prefetch=1,
        grid=(N,),
        in_specs=[
            feat_spec,                                       # clip features (per image)
            feat_spec,                                       # dino features (per image)
            pl.BlockSpec((R, Cp), lambda n, sc: (0, 0)),     # packed params (resident)
        ],
        out_specs=pl.BlockSpec((None, S2, Cp), lambda n, sc: (n, 0, 0)),
        scratch_shapes=[pltpu.VMEM((S2, D), jnp.float32)],
    )
    logits_pad = pl.pallas_call(
        dual_encoder_kernel,
        out_shape=jax.ShapeDtypeStruct((N, S2, Cp), jnp.float32),
        grid_spec=grid_spec,
        compiler_params=pltpu.CompilerParams(
            dimension_semantics=("parallel",)),
    )(scalars, clip_feat, dino_feat, packed)

    # == self.linear(attended_feat.unsqueeze(0)) per image -> (N, 2S, num_classes)
    return logits_pad[:, :, :num_classes]


def init_params(key, S, D, C):
    ks = jax.random.split(key, 6)
    return dict(
        # PositionalEncoding.position_embedding[0, :S, :]
        pos_emb=jax.random.normal(ks[0], (S, D), jnp.float32),
        # nn.Parameter(torch.ones(1))
        clip_weight=jnp.ones((1,), jnp.float32),
        dino_weight=jnp.ones((1,), jnp.float32),
        # MHA value projection (in_proj_weight[2E:3E].T, in_proj_bias[2E:3E])
        w_v=jax.random.normal(ks[1], (D, D), jnp.float32) * 0.02,
        b_v=jax.random.normal(ks[2], (1, D), jnp.float32) * 0.02,
        # MHA out_proj (torch default: bias init to zeros)
        w_o=jax.random.normal(ks[3], (D, D), jnp.float32) * 0.02,
        b_o=jnp.zeros((1, D), jnp.float32),
        # final nn.Linear(D, num_classes)
        w_lin=jax.random.normal(ks[4], (D, C), jnp.float32) * 0.02,
        b_lin=jax.random.normal(ks[5], (1, C), jnp.float32) * 0.02,
    )


if __name__ == "__main__":
    # N = images (parallel grid axis), B = S2-preprocessed crops per image,
    # S = tokens (= num_positions, perfect square), D = shared hidden dim
    # (clip_hidden == dino_hidden == embed_dim), C = num_classes.
    N, B, S, D, C = 2, 2, 64, 32, 100
    key = jax.random.PRNGKey(0)
    kc, kd, kp = jax.random.split(key, 3)
    clip_feat = jax.random.normal(kc, (N, B, S, D), jnp.float32)  # CLIP last_hidden_state
    dino_feat = jax.random.normal(kd, (N, B, S, D), jnp.float32)  # DINO last_hidden_state
    params = init_params(kp, S, D, C)
    # torch inits both weights to ones; use distinct values so the per-half
    # re-weighting path is actually exercised by the check.
    params["clip_weight"] = jnp.array([1.25], jnp.float32)
    params["dino_weight"] = jnp.array([0.75], jnp.float32)

    scalars, packed = prepare_params(params, S, D, C)
    logits = jax.block_until_ready(
        dual_encoder_forward(clip_feat, dino_feat, scalars, packed, C)
    )

    # pure-JAX f32 reference with the ORIGINAL (unfolded) per-image data flow.
    pe = params["pos_emb"]

    def ref_one(cf, df):
        ct = params["clip_weight"][0] * (cf.mean(0) + pe)
        dt = params["dino_weight"][0] * (df.mean(0) + pe)
        fused = jnp.concatenate([ct, dt], axis=0)
        v = fused @ params["w_v"] + params["b_v"]
        att = v @ params["w_o"] + params["b_o"]
        return att @ params["w_lin"] + params["b_lin"]

    ref = jax.vmap(ref_one)(clip_feat, dino_feat)

    assert logits.shape == (N, 2 * S, C), logits.shape
    # All-f32 data path (no bf16 casts): tight tolerance vs. the reference.
    assert jnp.allclose(logits, ref, atol=5e-4, rtol=5e-3), float(
        jnp.max(jnp.abs(logits - ref))
    )
    print("KERNEL_OK")
</pallas_src>

<mosaic_0001>
module attributes {stable_mosaic.version = 11 : i64} {
  func.func @dual_encoder_kernel(%arg0: i32, %arg1: memref<2xf32, #tpu.memory_space<smem>>, %arg2: memref<1x2x64x32xf32, #tpu.memory_space<vmem>>, %arg3: memref<1x2x64x32xf32, #tpu.memory_space<vmem>>, %arg4: memref<168x128xf32, #tpu.memory_space<vmem>>, %arg5: memref<1x128x128xf32, #tpu.memory_space<vmem>>, %arg6: memref<128x32xf32, #tpu.memory_space<vmem>>) attributes {dimension_semantics = [#tpu.dimension_semantics<parallel>], iteration_bounds = array<i64: 2>, scalar_prefetch = 1 : i64, scratch_operands = 1 : i64, tpu.core_type = #tpu.core_type<tc>, window_params = [{transform_indices = @transform_0, window_bounds = array<i64: 1, 2, 64, 32>}, {transform_indices = @transform_1, window_bounds = array<i64: 1, 2, 64, 32>}, {pipeline_mode = #tpu.pipeline_mode<synchronous>, transform_indices = @transform_2, window_bounds = array<i64: 168, 128>}, {transform_indices = @transform_3, window_bounds = array<i64: 1, 128, 128>}]} {
    %c0 = arith.constant 0 : index
    %c0_0 = arith.constant 0 : index
    %c0_1 = arith.constant 0 : index
    %c0_2 = arith.constant 0 : index
    %0 = vector.load %arg2[%c0, %c0_0, %c0_1, %c0_2] : memref<1x2x64x32xf32, #tpu.memory_space<vmem>>, vector<1x2x64x32xf32>
    %1 = vector.shape_cast %0 : vector<1x2x64x32xf32> to vector<2x64x32xf32>
    %cst = arith.constant dense<0.000000e+00> : vector<64x32xf32>
    %2 = vector.multi_reduction <add>, %1, %cst [0] : vector<2x64x32xf32> to vector<64x32xf32>
    %cst_3 = arith.constant 2.000000e+00 : f32
    %3 = vector.broadcast %cst_3 : f32 to vector<64x32xf32>
    %4 = arith.divf %2, %3 : vector<64x32xf32>
    %c0_4 = arith.constant 0 : index
    %c0_5 = arith.constant 0 : index
    %5 = vector.load %arg6[%c0_4, %c0_5] : memref<128x32xf32, #tpu.memory_space<vmem>>, vector<64x32xf32>
    tpu.vector_store %arg6[%c0_4, %c0_5], %4 {strides = array<i32>} : memref<128x32xf32, #tpu.memory_space<vmem>>, vector<64x32xf32>,
    %c0_6 = arith.constant 0 : index
    %c0_7 = arith.constant 0 : index
    %c0_8 = arith.constant 0 : index
    %c0_9 = arith.constant 0 : index
    %6 = vector.load %arg3[%c0_6, %c0_7, %c0_8, %c0_9] : memref<1x2x64x32xf32, #tpu.memory_space<vmem>>, vector<1x2x64x32xf32>
    %7 = vector.shape_cast %6 : vector<1x2x64x32xf32> to vector<2x64x32xf32>
    %cst_10 = arith.constant dense<0.000000e+00> : vector<64x32xf32>
    %8 = vector.multi_reduction <add>, %7, %cst_10 [0] : vector<2x64x32xf32> to vector<64x32xf32>
    %cst_11 = arith.constant 2.000000e+00 : f32
    %9 = vector.broadcast %cst_11 : f32 to vector<64x32xf32>
    %10 = arith.divf %8, %9 : vector<64x32xf32>
    %c64 = arith.constant 64 : index
    %c0_12 = arith.constant 0 : index
    %11 = vector.load %arg6[%c64, %c0_12] : memref<128x32xf32, #tpu.memory_space<vmem>>, vector<64x32xf32>
    tpu.vector_store %arg6[%c64, %c0_12], %10 {strides = array<i32>} : memref<128x32xf32, #tpu.memory_space<vmem>>, vector<64x32xf32>,
    %c0_13 = arith.constant 0 : index
    %c0_14 = arith.constant 0 : index
    %12 = vector.load %arg4[%c0_13, %c0_14] : memref<168x128xf32, #tpu.memory_space<vmem>>, vector<128x128xf32>
    %c128 = arith.constant 128 : index
    %c0_15 = arith.constant 0 : index
    %13 = vector.load %arg4[%c128, %c0_15] : memref<168x128xf32, #tpu.memory_space<vmem>>, vector<32x128xf32>
    %c160 = arith.constant 160 : index
    %c0_16 = arith.constant 0 : index
    %14 = vector.load %arg4[%c160, %c0_16] : memref<168x128xf32, #tpu.memory_space<vmem>>, vector<1x128xf32>
    %15 = tpu.iota {dimensions = array<i32: 0>} : vector<128x1xi32>
    %c64_i32 = arith.constant 64 : i32
    %16 = vector.broadcast %c64_i32 : i32 to vector<128x1xi32>
    %17 = arith.cmpi slt, %15, %16 : vector<128x1xi32>
    %c0_17 = arith.constant 0 : index
    %18 = memref.load %arg1[%c0_17] : memref<2xf32, #tpu.memory_space<smem>>
    %c1 = arith.constant 1 : index
    %19 = memref.load %arg1[%c1] : memref<2xf32, #tpu.memory_space<smem>>
    %20 = vector.broadcast %18 : f32 to vector<128x1xf32>
    %21 = vector.broadcast %19 : f32 to vector<128x1xf32>
    %22 = arith.select %17, %20, %21 : vector<128x1xi1>, vector<128x1xf32>
    %c0_18 = arith.constant 0 : index
    %c0_19 = arith.constant 0 : index
    %23 = vector.load %arg6[%c0_18, %c0_19] : memref<128x32xf32, #tpu.memory_space<vmem>>, vector<128x32xf32>
    %cst_20 = arith.constant dense<0.000000e+00> : vector<128x128xf32>
    %24 = tpu.matmul %23, %13, %cst_20 {dimension_numbers = #tpu.dot_dimension_numbers<[1], [0], [0], [1], [0, 0, 1, 1], [], []>} : vector<128x32xf32>, vector<32x128xf32>, vector<128x128xf32> -> vector<128x128xf32>
    %25 = arith.addf %24, %12 : vector<128x128xf32>
    %26 = vector.broadcast %22 : vector<128x1xf32> to vector<128x128xf32>
    %27 = arith.mulf %26, %25 : vector<128x128xf32>
    %28 = vector.broadcast %14 : vector<1x128xf32> to vector<128x128xf32>
    %29 = arith.addf %27, %28 : vector<128x128xf32>
    %c0_21 = arith.constant 0 : index
    %c0_22 = arith.constant 0 : index
    %c0_23 = arith.constant 0 : index
    %30 = vector.load %arg5[%c0_21, %c0_22, %c0_23] : memref<1x128x128xf32, #tpu.memory_space<vmem>>, vector<1x128x128xf32>
    %31 = vector.shape_cast %30 : vector<1x128x128xf32> to vector<128x128xf32>
    %32 = vector.shape_cast %29 : vector<128x128xf32> to vector<1x128x128xf32>
    tpu.vector_store %arg5[%c0_21, %c0_22, %c0_23], %32 {strides = array<i32>} : memref<1x128x128xf32, #tpu.memory_space<vmem>>, vector<1x128x128xf32>,
    return
  }
  func.func @transform_0(%arg0: i32, %arg1: memref<2xf32, #tpu.memory_space<smem>>) -> (i32, i32, i32, i32) {
    %c0_i32 = arith.constant 0 : i32
    %c0_i32_0 = arith.constant 0 : i32
    %c0_i32_1 = arith.constant 0 : i32
    %c0_i32_2 = arith.constant 0 : i32
    return %arg0, %c0_i32, %c0_i32_0, %c0_i32_1 : i32, i32, i32, i32
  }
  func.func @transform_1(%arg0: i32, %arg1: memref<2xf32, #tpu.memory_space<smem>>) -> (i32, i32, i32, i32) {
    %c0_i32 = arith.constant 0 : i32
    %c0_i32_0 = arith.constant 0 : i32
    %c0_i32_1 = arith.constant 0 : i32
    %c0_i32_2 = arith.constant 0 : i32
    return %arg0, %c0_i32, %c0_i32_0, %c0_i32_1 : i32, i32, i32, i32
  }
  func.func @transform_2(%arg0: i32, %arg1: memref<2xf32, #tpu.memory_space<smem>>) -> (i32, i32) {
    %c0_i32 = arith.constant 0 : i32
    %c0_i32_0 = arith.constant 0 : i32
    %c0_i32_1 = arith.constant 0 : i32
    return %c0_i32, %c0_i32_0 : i32, i32
  }
  func.func @transform_3(%arg0: i32, %arg1: memref<2xf32, #tpu.memory_space<smem>>) -> (i32, i32, i32) {
    %c0_i32 = arith.constant 0 : i32
    %c0_i32_0 = arith.constant 0 : i32
    %c0_i32_1 = arith.constant 0 : i32
    return %arg0, %c0_i32, %c0_i32_0 : i32, i32, i32
  }
}

</mosaic_0001>

<llo_original>
// kernel: tpu_custom_call.1
$region0: #{tpu_custom_call.1}
  #allocation0 [shape = 'u32[]', space=smem, size = 0x4, offset = 0x4, fixed_abs, tag = 'smem constant byte address 0x4 - core index']
  #allocation1 [shape = 'u32[144,128]{1,0:T(1,128)}', space=vmem, size = 0x12000, scoped, tag = 'internal scratch']
  #allocation2 [shape = 'f32[128,32]{1,0:T(8,128)}', space=vmem, size = 0x10000, scoped, tag = 'scratch operand']
  #allocation3 [shape = 's32[1]{0}', space=sflag, size = 0x4, scoped, tag = 'scoped memory for tpu_custom_call.1']
  #allocation4 [shape = 'u8[512]{0}', space=smem, size = 0x200, scoped, tag = 'prefetched SMEM operand 0']
  %s0 = inlined_call_operand.vmem [shape: f32[2], index: 0, kind: input, shape index: {}]
  %s1 = inlined_call_operand.vmem [shape: f32[2,2,64,32], index: 1, kind: input, shape index: {}]
  %s2 = inlined_call_operand.vmem [shape: f32[2,2,64,32], index: 2, kind: input, shape index: {}]
  %s3 = inlined_call_operand.vmem [shape: f32[168,128], index: 3, kind: input, shape index: {}]
  %s4 = inlined_call_operand.hbm [shape: f32[2,128,128], index: 4, kind: output, shape index: {}]
  %s5 = sld [smem:[#allocation0]]
  $region45: #{tpu_custom_call.1} parent=0
    _
  %s7 = ssub.s32 1, %s5
  %s8 = scalar_select 0, %s7, %s5
  %s9 = sshll.u32 %s0, 4
  %s10 = int_to_ptr.vmem [resolvable:$true] %s9
  %12 = dma.vmem_to_smem %s10, 16, [#allocation4], [#allocation3]
  %13 = dma.done [#allocation3], 16
  %14 = sfence
  $region1: #{tpu_custom_call.1} parent=0
    #allocation5 [shape = 'u8[131072]{0}', space=vmem, size = 0x20000, scoped, tag = 'output window, operand 0']
    #allocation6 [shape = 's32[2]{0}', space=sflag, size = 0x8, scoped, tag = 'scoped memory for tpu_custom_call.1']
    %15 = vsyncpa [#allocation6], 0
    %s16 = scalar_lea.sflag [#allocation6], 1
    %17 = vsyncpa %s16, 0
    loop: start=0, step=1, limit=4
    $region2: #{tpu_custom_call.1} parent=1 // loop_pre_header
      _
    $region3: #{tpu_custom_call.1} parent=1 // loop_header
      %s19 = sphi 0, %s23
      %p20 = scmp.ge.s32.totalorder %s19, 4
      %s29 = sphi 0, %s31
      %s32 = sphi 0, %s29
      %s33 = sphi 0, %s32
      %s49 = sphi 0, %s33
      %s55 = sphi 0, %s57
      %s58 = sphi 0, %s55
      %s59 = sphi 0, %s58
      %s75 = sphi 0, %s59
      %s79 = sphi 0, %s79
      %s81 = sphi 0, %s79
      %s82 = sphi 0, %s81
      %s96 = sphi 0, %s82
      %s102 = sphi 0, %s104
      %s105 = sphi 0, %s102
      %s106 = sphi 0, %s105
      %s122 = sphi 0, %s106
    $region4: #{tpu_custom_call.1} parent=1 // loop_header_branch
      %22 = sbr.rel (%p20) target = $region8
    $region5: #{tpu_custom_call.1} parent=1 // loop_body
      %s24 = ssub.s32 %s19, 1
      %s25 = ssub.s32 %s19, 2
      %s26 = sadd.s32 %s19, 1
      %s27 = ssub.s32 %s19, %s26
      %p28 = scmp.eq.s32.totalorder %s27, 0
      %s30 = sadd.s32 %s29, 1
      %s31 = scalar_select %p28, %s29, %s30
      %p34 = pneg %p28
      %p35 = scmp.eq.s32.totalorder %s19, 1
      %p36 = por %p34, %p35
      %p37 = scmp.ne.s32.totalorder %s29, %s32
      %p38 = scmp.eq.s32.totalorder %s19, 0
      %p39 = por %p37, %p38
      %p40 = scmp.ne.s32.totalorder %s29, %s32
      %p41 = scmp.eq.s32.totalorder %s24, 1
      %p42 = por %p40, %p41
      %p43 = scmp.ne.s32.totalorder %s32, %s33
      %p44 = scmp.eq.s32.totalorder %s24, 0
      %p45 = por %p43, %p44
      %p46 = scmp.ne.s32.totalorder %s32, %s33
      %p47 = scmp.eq.s32.totalorder %s25, 1
      %p48 = por %p46, %p47
      %p50 = scmp.ne.s32.totalorder %s33, %s49
      %p51 = scmp.eq.s32.totalorder %s25, 0
      %p52 = por %p50, %p51
      %s53 = ssub.s32 %s19, %s26
      %p54 = scmp.eq.s32.totalorder %s53, 0
      %s56 = sadd.s32 %s55, 1
      %s57 = scalar_select %p54, %s55, %s56
      %p60 = pneg %p54
      %p61 = scmp.eq.s32.totalorder %s19, 1
      %p62 = por %p60, %p61
      %p63 = scmp.ne.s32.totalorder %s55, %s58
      %p64 = scmp.eq.s32.totalorder %s19, 0
      %p65 = por %p63, %p64
      %p66 = scmp.ne.s32.totalorder %s55, %s58
      %p67 = scmp.eq.s32.totalorder %s24, 1
      %p68 = por %p66, %p67
      %p69 = scmp.ne.s32.totalorder %s58, %s59
      %p70 = scmp.eq.s32.totalorder %s24, 0
      %p71 = por %p69, %p70
      %p72 = scmp.ne.s32.totalorder %s58, %s59
      %p73 = scmp.eq.s32.totalorder %s25, 1
      %p74 = por %p72, %p73
      %p76 = scmp.ne.s32.totalorder %s59, %s75
      %p77 = scmp.eq.s32.totalorder %s25, 0
      %p78 = por %p76, %p77
      %s80 = sadd.s32 %s79, 1
      %p83 = scmp.eq.s32.totalorder %s19, 1
      %p84 = scmp.ne.s32.totalorder %s79, %s81
      %p85 = scmp.eq.s32.totalorder %s19, 0
      %p86 = por %p84, %p85
      %p87 = scmp.ne.s32.totalorder %s79, %s81
      %p88 = scmp.eq.s32.totalorder %s24, 1
      %p89 = por %p87, %p88
      %p90 = scmp.ne.s32.totalorder %s81, %s82
      %p91 = scmp.eq.s32.totalorder %s24, 0
      %p92 = por %p90, %p91
      %p93 = scmp.ne.s32.totalorder %s81, %s82
      %p94 = scmp.eq.s32.totalorder %s25, 1
      %p95 = por %p93, %p94
      %p97 = scmp.ne.s32.totalorder %s82, %s96
      %p98 = scmp.eq.s32.totalorder %s25, 0
      %p99 = por %p97, %p98
      %s100 = ssub.s32 %s19, %s26
      %p101 = scmp.eq.s32.totalorder %s100, 0
      %s103 = sadd.s32 %s102, 1
      %s104 = scalar_select %p101, %s102, %s103
      %p107 = pneg %p101
      %p108 = scmp.eq.s32.totalorder %s19, 1
      %p109 = por %p107, %p108
      %p110 = scmp.ne.s32.totalorder %s102, %s105
      %p111 = scmp.eq.s32.totalorder %s19, 0
      %p112 = por %p110, %p111
      %p113 = scmp.ne.s32.totalorder %s102, %s105
      %p114 = scmp.eq.s32.totalorder %s24, 1
      %p115 = por %p113, %p114
      %p116 = scmp.ne.s32.totalorder %s105, %s106
      %p117 = scmp.eq.s32.totalorder %s24, 0
      %p118 = por %p116, %p117
      %p119 = scmp.ne.s32.totalorder %s105, %s106
      %p120 = scmp.eq.s32.totalorder %s25, 1
      %p121 = por %p119, %p120
      %p123 = scmp.ne.s32.totalorder %s106, %s122
      %p124 = scmp.eq.s32.totalorder %s25, 0
      %p125 = por %p123, %p124
      %p126 = scmp.le.s32.totalorder 1, %s19
      %p127 = scmp.lt.s32.totalorder %s19, 3
      %p128 = pnand %p126, %p127
      %p129 = pneg %p128
      // Predicated region
      $region9: #{tpu_custom_call.1} parent=5 // pred_check
        _
      $region10: #{tpu_custom_call.1} parent=5 // pred_check_branch
        %131 = sbr.rel (%p128) target = $region12
      $region11: #{tpu_custom_call.1} parent=5 // pred_region
        %s132 = ssub.s32 %s19, 1
        // Predicated region
        $region13: #{tpu_custom_call.1} parent=11 // pred_check
          %p133 = pneg %p92
        $region14: #{tpu_custom_call.1} parent=11 // pred_check_branch
          %135 = sbr.rel (%p133) target = $region16
        $region15: #{tpu_custom_call.1} parent=11 // pred_region
          _
        $region16: #{tpu_custom_call.1} parent=11 // pred_fallthru
          _
      $region12: #{tpu_custom_call.1} parent=5 // pred_fallthru
        _
      %p136 = scmp.lt.s32.totalorder %s19, 2
      // Predicated region
      $region17: #{tpu_custom_call.1} parent=5 // pred_check
        %p137 = pneg %p136
      $region18: #{tpu_custom_call.1} parent=5 // pred_check_branch
        %139 = sbr.rel (%p137) target = $region20
      $region19: #{tpu_custom_call.1} parent=5 // pred_region
        // Predicated region
        $region21: #{tpu_custom_call.1} parent=19 // pred_check
          %p140 = pneg %p39
        $region22: #{tpu_custom_call.1} parent=19 // pred_check_branch
          %142 = sbr.rel (%p140) target = $region24
        $region23: #{tpu_custom_call.1} parent=19 // pred_region
          %p143 = scmp.lt.s32.totalorder %s19, 1
          %s144 = scalar_select %p143, %s19, 1
          %s145 = smul.addr %s144, 16
          %s146 = smul.addr %s145, 8
          %s147 = scalar_lea.vmem %s1, %s146
        $region24: #{tpu_custom_call.1} parent=19 // pred_fallthru
          _
        // Predicated region
        $region25: #{tpu_custom_call.1} parent=19 // pred_check
          %p148 = pneg %p65
        $region26: #{tpu_custom_call.1} parent=19 // pred_check_branch
          %150 = sbr.rel (%p148) target = $region28
        $region27: #{tpu_custom_call.1} parent=19 // pred_region
          %p151 = scmp.lt.s32.totalorder %s19, 1
          %s152 = scalar_select %p151, %s19, 1
          %s153 = smul.addr %s152, 16
          %s154 = smul.addr %s153, 8
          %s155 = scalar_lea.vmem %s2, %s154
        $region28: #{tpu_custom_call.1} parent=19 // pred_fallthru
          _
      $region20: #{tpu_custom_call.1} parent=5 // pred_fallthru
        _
      %p156 = scmp.le.s32.totalorder 1, %s19
      %p157 = scmp.lt.s32.totalorder %s19, 3
      %p158 = pnand %p156, %p157
      %p159 = pneg %p158
      // Predicated region
      $region29: #{tpu_custom_call.1} parent=5 // pred_check
        _
      $region30: #{tpu_custom_call.1} parent=5 // pred_check_branch
        %161 = sbr.rel (%p158) target = $region32
      $region31: #{tpu_custom_call.1} parent=5 // pred_region
        %s162 = ssub.s32 %s19, 1
        %p163 = scmp.lt.s32.totalorder %s24, 1
        %s164 = scalar_select %p163, %s24, 1
        %s165 = smul.addr %s164, 16
        %s166 = smul.addr %s165, 8
        %s167 = scalar_lea.vmem %s1, %s166
        %p168 = pneg %p45
        %p169 = pneg %p42
        %p170 = scmp.lt.s32.totalorder %s24, 1
        %s171 = scalar_select %p170, %s24, 1
        %s172 = smul.addr %s171, 16
        %s173 = smul.addr %s172, 8
        %s174 = scalar_lea.vmem %s2, %s173
        %p175 = pneg %p71
        %p176 = pneg %p68
        %p177 = pneg %p92
        %p178 = pneg %p89
        %p179 = pneg %p118
        %p180 = pneg %p115
        %s181 = sand.u32 %s105, 1
        %s182 = scalar_lea.sflag [#allocation6], %s181
        %s183 = sand.u32 %s105, 1
        %s184 = smul.addr %s183, 128
        %s185 = scalar_lea.vmem [#allocation5], %s184
        %p186 = scmp.lt.s32.totalorder %s24, 1
        %s187 = scalar_select %p186, %s24, 1
        %s188 = smul.addr %s187, 16
        %s189 = smul.addr %s188, 8
        %s190 = scalar_lea.vmem %s1, %s189
        %p191 = scmp.lt.s32.totalorder %s24, 1
        %s192 = scalar_select %p191, %s24, 1
        %s193 = smul.addr %s192, 16
        %s194 = smul.addr %s193, 8
        %s195 = scalar_lea.vmem %s2, %s194
        %v196 = vld [vmem:[%s190] sm:$0xff]
        %v197 = vld [vmem:[%s190 + $0x8] sm:$0xff]
        %v198 = vld [vmem:[%s190 + $0x10] sm:$0xff]
        %v199 = vld [vmem:[%s190 + $0x18] sm:$0xff]
        %v200 = vld [vmem:[%s190 + $0x20] sm:$0xff]
        %v201 = vld [vmem:[%s190 + $0x28] sm:$0xff]
        %v202 = vld [vmem:[%s190 + $0x30] sm:$0xff]
        %v203 = vld [vmem:[%s190 + $0x38] sm:$0xff]
        %v204 = vld [vmem:[%s190 + $0x40] sm:$0xff]
        %v205 = vld [vmem:[%s190 + $0x48] sm:$0xff]
        %v206 = vld [vmem:[%s190 + $0x50] sm:$0xff]
        %v207 = vld [vmem:[%s190 + $0x58] sm:$0xff]
        %v208 = vld [vmem:[%s190 + $0x60] sm:$0xff]
        %v209 = vld [vmem:[%s190 + $0x68] sm:$0xff]
        %v210 = vld [vmem:[%s190 + $0x70] sm:$0xff]
        %v211 = vld [vmem:[%s190 + $0x78] sm:$0xff]
        %vm212 = vcmask 261120
        %v213 = vsel %vm212, %v196, 0.0
        %v214 = vsel %vm212, %v204, 0.0
        %v215 = vadd.f32 %v213, %v214
        %v216 = vsel %vm212, %v197, 0.0
        %v217 = vsel %vm212, %v205, 0.0
        %v218 = vadd.f32 %v216, %v217
        %v219 = vsel %vm212, %v198, 0.0
        %v220 = vsel %vm212, %v206, 0.0
        %v221 = vadd.f32 %v219, %v220
        %v222 = vsel %vm212, %v199, 0.0
        %v223 = vsel %vm212, %v207, 0.0
        %v224 = vadd.f32 %v222, %v223
        %v225 = vsel %vm212, %v200, 0.0
        %v226 = vsel %vm212, %v208, 0.0
        %v227 = vadd.f32 %v225, %v226
        %v228 = vsel %vm212, %v201, 0.0
        %v229 = vsel %vm212, %v209, 0.0
        %v230 = vadd.f32 %v228, %v229
        %v231 = vsel %vm212, %v202, 0.0
        %v232 = vsel %vm212, %v210, 0.0
        %v233 = vadd.f32 %v231, %v232
        %v234 = vsel %vm212, %v203, 0.0
        %v235 = vsel %vm212, %v211, 0.0
        %v236 = vadd.f32 %v234, %v235
        %v237 = vrcp.pop 2.0
        %v238 = vmul.f32 %v215, %v237
        %v239 = vmul.f32 %v218, %v237
        %v240 = vmul.f32 %v221, %v237
        %v241 = vmul.f32 %v224, %v237
        %v242 = vmul.f32 %v227, %v237
        %v243 = vmul.f32 %v230, %v237
        %v244 = vmul.f32 %v233, %v237
        %v245 = vmul.f32 %v236, %v237
        %246 = vst.msk [vmem:[#allocation2] sm:$0xff] %vm212, %v238
        %247 = vst.msk [vmem:[#allocation2 + $0x8] sm:$0xff] %vm212, %v239
        %248 = vst.msk [vmem:[#allocation2 + $0x10] sm:$0xff] %vm212, %v240
        %249 = vst.msk [vmem:[#allocation2 + $0x18] sm:$0xff] %vm212, %v241
        %250 = vst.msk [vmem:[#allocation2 + $0x20] sm:$0xff] %vm212, %v242
        %251 = vst.msk [vmem:[#allocation2 + $0x28] sm:$0xff] %vm212, %v243
        %252 = vst.msk [vmem:[#allocation2 + $0x30] sm:$0xff] %vm212, %v244
        %253 = vst.msk [vmem:[#allocation2 + $0x38] sm:$0xff] %vm212, %v245
        %v254 = vld [vmem:[%s195] sm:$0xff]
        %v255 = vld [vmem:[%s195 + $0x8] sm:$0xff]
        %v256 = vld [vmem:[%s195 + $0x10] sm:$0xff]
        %v257 = vld [vmem:[%s195 + $0x18] sm:$0xff]
        %v258 = vld [vmem:[%s195 + $0x20] sm:$0xff]
        %v259 = vld [vmem:[%s195 + $0x28] sm:$0xff]
        %v260 = vld [vmem:[%s195 + $0x30] sm:$0xff]
        %v261 = vld [vmem:[%s195 + $0x38] sm:$0xff]
        %v262 = vld [vmem:[%s195 + $0x40] sm:$0xff]
        %v263 = vld [vmem:[%s195 + $0x48] sm:$0xff]
        %v264 = vld [vmem:[%s195 + $0x50] sm:$0xff]
        %v265 = vld [vmem:[%s195 + $0x58] sm:$0xff]
        %v266 = vld [vmem:[%s195 + $0x60] sm:$0xff]
        %v267 = vld [vmem:[%s195 + $0x68] sm:$0xff]
        %v268 = vld [vmem:[%s195 + $0x70] sm:$0xff]
        %v269 = vld [vmem:[%s195 + $0x78] sm:$0xff]
        %v270 = vsel %vm212, %v254, 0.0
        %v271 = vsel %vm212, %v262, 0.0
        %v272 = vadd.f32 %v270, %v271
        %v273 = vsel %vm212, %v255, 0.0
        %v274 = vsel %vm212, %v263, 0.0
        %v275 = vadd.f32 %v273, %v274
        %v276 = vsel %vm212, %v256, 0.0
        %v277 = vsel %vm212, %v264, 0.0
        %v278 = vadd.f32 %v276, %v277
        %v279 = vsel %vm212, %v257, 0.0
        %v280 = vsel %vm212, %v265, 0.0
        %v281 = vadd.f32 %v279, %v280
        %v282 = vsel %vm212, %v258, 0.0
        %v283 = vsel %vm212, %v266, 0.0
        %v284 = vadd.f32 %v282, %v283
        %v285 = vsel %vm212, %v259, 0.0
        %v286 = vsel %vm212, %v267, 0.0
        %v287 = vadd.f32 %v285, %v286
        %v288 = vsel %vm212, %v260, 0.0
        %v289 = vsel %vm212, %v268, 0.0
        %v290 = vadd.f32 %v288, %v289
        %v291 = vsel %vm212, %v261, 0.0
        %v292 = vsel %vm212, %v269, 0.0
        %v293 = vadd.f32 %v291, %v292
        %v294 = vmul.f32 %v272, %v237
        %v295 = vmul.f32 %v275, %v237
        %v296 = vmul.f32 %v278, %v237
        %v297 = vmul.f32 %v281, %v237
        %v298 = vmul.f32 %v284, %v237
        %v299 = vmul.f32 %v287, %v237
        %v300 = vmul.f32 %v290, %v237
        %v301 = vmul.f32 %v293, %v237
        %302 = vst.msk [vmem:[#allocation2 + $0x40] sm:$0xff] %vm212, %v294
        %303 = vst.msk [vmem:[#allocation2 + $0x48] sm:$0xff] %vm212, %v295
        %304 = vst.msk [vmem:[#allocation2 + $0x50] sm:$0xff] %vm212, %v296
        %305 = vst.msk [vmem:[#allocation2 + $0x58] sm:$0xff] %vm212, %v297
        %306 = vst.msk [vmem:[#allocation2 + $0x60] sm:$0xff] %vm212, %v298
        %307 = vst.msk [vmem:[#allocation2 + $0x68] sm:$0xff] %vm212, %v299
        %308 = vst.msk [vmem:[#allocation2 + $0x70] sm:$0xff] %vm212, %v300
        %309 = vst.msk [vmem:[#allocation2 + $0x78] sm:$0xff] %vm212, %v301
        %v310 = vld [vmem:[%s3] sm:$0xff]
        %v311 = vld [vmem:[%s3 + $0x8] sm:$0xff]
        %v312 = vld [vmem:[%s3 + $0x10] sm:$0xff]
        %v313 = vld [vmem:[%s3 + $0x18] sm:$0xff]
        %v314 = vld [vmem:[%s3 + $0x20] sm:$0xff]
        %v315 = vld [vmem:[%s3 + $0x28] sm:$0xff]
        %v316 = vld [vmem:[%s3 + $0x30] sm:$0xff]
        %v317 = vld [vmem:[%s3 + $0x38] sm:$0xff]
        %v318 = vld [vmem:[%s3 + $0x40] sm:$0xff]
        %v319 = vld [vmem:[%s3 + $0x48] sm:$0xff]
        %v320 = vld [vmem:[%s3 + $0x50] sm:$0xff]
        %v321 = vld [vmem:[%s3 + $0x58] sm:$0xff]
        %v322 = vld [vmem:[%s3 + $0x60] sm:$0xff]
        %v323 = vld [vmem:[%s3 + $0x68] sm:$0xff]
        %v324 = vld [vmem:[%s3 + $0x70] sm:$0xff]
        %v325 = vld [vmem:[%s3 + $0x78] sm:$0xff]
        %v326 = vld [vmem:[%s3 + $0x80] sm:$0xff]
        %v327 = vld [vmem:[%s3 + $0x88] sm:$0xff]
        %v328 = vld [vmem:[%s3 + $0x90] sm:$0xff]
        %v329 = vld [vmem:[%s3 + $0x98] sm:$0xff]
        %v330 = vld [vmem:[%s3 + $0xa0] sm:$0x1]
        %v331 = vlaneseq
        %v332 = vshrl.u32 %v331, 7
        %v333 = vadd.s32 %v332, 8
        %v334 = vadd.s32 %v332, 16
        %v335 = vadd.s32 %v332, 24
        %v336 = vadd.s32 %v332, 32
        %v337 = vadd.s32 %v332, 40
        %v338 = vadd.s32 %v332, 48
        %v339 = vadd.s32 %v332, 56
        %v340 = vadd.s32 %v332, 64
        %v341 = vadd.s32 %v332, 72
        %v342 = vadd.s32 %v332, 80
        %v343 = vadd.s32 %v332, 88
        %v344 = vadd.s32 %v332, 96
        %v345 = vadd.s32 %v332, 104
        %v346 = vadd.s32 %v332, 112
        %v347 = vadd.s32 %v332, 120
        %vm348 = vcmp.lt.s32.totalorder %v332, 64
        %vm349 = vcmp.lt.s32.totalorder %v333, 64
        %vm350 = vcmp.lt.s32.totalorder %v334, 64
        %vm351 = vcmp.lt.s32.totalorder %v335, 64
        %vm352 = vcmp.lt.s32.totalorder %v336, 64
        %vm353 = vcmp.lt.s32.totalorder %v337, 64
        %vm354 = vcmp.lt.s32.totalorder %v338, 64
        %vm355 = vcmp.lt.s32.totalorder %v339, 64
        %vm356 = vcmp.lt.s32.totalorder %v340, 64
        %vm357 = vcmp.lt.s32.totalorder %v341, 64
        %vm358 = vcmp.lt.s32.totalorder %v342, 64
        %vm359 = vcmp.lt.s32.totalorder %v343, 64
        %vm360 = vcmp.lt.s32.totalorder %v344, 64
        %vm361 = vcmp.lt.s32.totalorder %v345, 64
        %vm362 = vcmp.lt.s32.totalorder %v346, 64
        %vm363 = vcmp.lt.s32.totalorder %v347, 64
        %s364 = sld [smem:[#allocation4]]
        %s365 = sld [smem:[#allocation4 + $0x1]]
        %v366 = vstv %s364
        %v367 = vstv %s365
        %v368 = vsel %vm348, %v366, %v367
        %v369 = vsel %vm349, %v366, %v367
        %v370 = vsel %vm350, %v366, %v367
        %v371 = vsel %vm351, %v366, %v367
        %v372 = vsel %vm352, %v366, %v367
        %v373 = vsel %vm353, %v366, %v367
        %v374 = vsel %vm354, %v366, %v367
        %v375 = vsel %vm355, %v366, %v367
        %v376 = vsel %vm356, %v366, %v367
        %v377 = vsel %vm357, %v366, %v367
        %v378 = vsel %vm358, %v366, %v367
        %v379 = vsel %vm359, %v366, %v367
        %v380 = vsel %vm360, %v366, %v367
        %v381 = vsel %vm361, %v366, %v367
        %v382 = vsel %vm362, %v366, %v367
        %v383 = vsel %vm363, %v366, %v367
        %v384 = vld [vmem:[#allocation2] sm:$0xff]
        %v385 = vld [vmem:[#allocation2 + $0x8] sm:$0xff]
        %v386 = vld [vmem:[#allocation2 + $0x10] sm:$0xff]
        %v387 = vld [vmem:[#allocation2 + $0x18] sm:$0xff]
        %v388 = vld [vmem:[#allocation2 + $0x20] sm:$0xff]
        %v389 = vld [vmem:[#allocation2 + $0x28] sm:$0xff]
        %v390 = vld [vmem:[#allocation2 + $0x30] sm:$0xff]
        %v391 = vld [vmem:[#allocation2 + $0x38] sm:$0xff]
        %v392 = vld [vmem:[#allocation2 + $0x40] sm:$0xff]
        %v393 = vld [vmem:[#allocation2 + $0x48] sm:$0xff]
        %v394 = vld [vmem:[#allocation2 + $0x50] sm:$0xff]
        %v395 = vld [vmem:[#allocation2 + $0x58] sm:$0xff]
        %v396 = vld [vmem:[#allocation2 + $0x60] sm:$0xff]
        %v397 = vld [vmem:[#allocation2 + $0x68] sm:$0xff]
        %v398 = vld [vmem:[#allocation2 + $0x70] sm:$0xff]
        %v399 = vld [vmem:[#allocation2 + $0x78] sm:$0xff]
        %v401 = vsel %vm212, %v384, 0
        %v404 = vsel %vm212, %v385, 0
        %v407 = vsel %vm212, %v386, 0
        %v410 = vsel %vm212, %v387, 0
        %v413 = vsel %vm212, %v388, 0
        %v416 = vsel %vm212, %v389, 0
        %v419 = vsel %vm212, %v390, 0
        %v422 = vsel %vm212, %v391, 0
        %v425 = vsel %vm212, %v392, 0
        %v428 = vsel %vm212, %v393, 0
        %v431 = vsel %vm212, %v394, 0
        %v434 = vsel %vm212, %v395, 0
        %v437 = vsel %vm212, %v396, 0
        %v440 = vsel %vm212, %v397, 0
        %v443 = vsel %vm212, %v398, 0
        %v446 = vsel %vm212, %v399, 0
        %448 = vmatprep.subr.mxu0 0.0
        %449 = vmatpush1.msra.mxu0 %v326
        %450 = vmatprep.subr.mxu0 0.0
        %451 = vmatpush1.msra.mxu0 %v327
        %452 = vmatprep.subr.mxu0 0.0
        %453 = vmatpush1.msra.mxu0 %v328
        %454 = vmatprep.subr.mxu0 0.0
        %455 = vmatpush1.msra.mxu0 %v329
        %456 = vmatprep.subr.mxu0 0.0
        %457 = vmatpush1.msra.mxu0 0.0
        %458 = vmatprep.subr.mxu0 0.0
        %459 = vmatpush1.msra.mxu0 0.0
        %460 = vmatprep.subr.mxu0 0.0
        %461 = vmatpush1.msra.mxu0 0.0
        %462 = vmatprep.subr.mxu0 0.0
        %463 = vmatpush1.msra.mxu0 0.0
        %464 = vmatprep.subr.mxu0 0.0
        %465 = vmatpush1.msra.mxu0 0.0
        %466 = vmatprep.subr.mxu0 0.0
        %467 = vmatpush1.msra.mxu0 0.0
        %468 = vmatprep.subr.mxu0 0.0
        %469 = vmatpush1.msra.mxu0 0.0
        %470 = vmatprep.subr.mxu0 0.0
        %471 = vmatpush1.msra.mxu0 0.0
        %472 = vmatprep.subr.mxu0 0.0
        %473 = vmatpush1.msra.mxu0 0.0
        %474 = vmatprep.subr.mxu0 0.0
        %475 = vmatpush1.msra.mxu0 0.0
        %476 = vmatprep.subr.mxu0 0.0
        %477 = vmatpush1.msra.mxu0 0.0
        %478 = vmatprep.subr.mxu0 0.0
        %479 = vmatpush1.msra.mxu0 0.0
        %480 = vmatprep.subr.mxu0 0.0
        %481 = vmatpush1.msra.mxu0 0.0
        %482 = vmatprep.subr.mxu0 0.0
        %483 = vmatpush1.msra.mxu0 0.0
        %484 = vmatprep.subr.mxu0 0.0
        %485 = vmatpush1.msra.mxu0 0.0
        %486 = vmatprep.subr.mxu0 0.0
        %487 = vmatpush1.msra.mxu0 0.0
        %488 = vmatprep.subr.mxu0 0.0
        %489 = vmatpush1.msra.mxu0 0.0
        %490 = vmatprep.subr.mxu0 0.0
        %491 = vmatpush1.msra.mxu0 0.0
        %492 = vmatprep.subr.mxu0 0.0
        %493 = vmatpush1.msra.mxu0 0.0
        %494 = vmatprep.subr.mxu0 0.0
        %495 = vmatpush1.msra.mxu0 0.0
        %496 = vmatprep.subr.mxu0 0.0
        %497 = vmatpush1.msra.mxu0 0.0
        %498 = vmatprep.subr.mxu0 0.0
        %499 = vmatpush1.msra.mxu0 0.0
        %500 = vmatprep.subr.mxu0 0.0
        %501 = vmatpush1.msra.mxu0 0.0
        %502 = vmatprep.subr.mxu0 0.0
        %503 = vmatpush1.msra.mxu0 0.0
        %504 = vmatprep.subr.mxu0 0.0
        %505 = vmatpush1.msra.mxu0 0.0
        %506 = vmatprep.subr.mxu0 0.0
        %507 = vmatpush1.msra.mxu0 0.0
        %508 = vmatprep.subr.mxu0 0.0
        %509 = vmatpush1.msra.mxu0 0.0
        %510 = vmatprep.subr.mxu0 0.0
        %511 = vmatpush1.msra.mxu0 0.0
        %512 = vmatprep.mubr.f32.mxu0 0.0
        %513 = vmatmul.mubr.f32.gmra.mrb[0].mxu0 %v401
        %v514 = vpop.f32.mrb[0].mxu0
        %v515 = vadd.f32 %v310, %v514
        %v516 = vpop.f32.mrb[0].mxu0
        %517 = vmatprep.mubr.f32.mxu0 0.0
        %518 = vmatmul.mubr.f32.gmra.mrb[0].mxu0 %v404
        %v519 = vpop.f32.mrb[0].mxu0
        %v520 = vadd.f32 %v311, %v519
        %v521 = vpop.f32.mrb[0].mxu0
        %522 = vmatprep.mubr.f32.mxu0 0.0
        %523 = vmatmul.mubr.f32.gmra.mrb[0].mxu0 %v407
        %v524 = vpop.f32.mrb[0].mxu0
        %v525 = vadd.f32 %v312, %v524
        %v526 = vpop.f32.mrb[0].mxu0
        %527 = vmatprep.mubr.f32.mxu0 0.0
        %528 = vmatmul.mubr.f32.gmra.mrb[0].mxu0 %v410
        %v529 = vpop.f32.mrb[0].mxu0
        %v530 = vadd.f32 %v313, %v529
        %v531 = vpop.f32.mrb[0].mxu0
        %532 = vmatprep.mubr.f32.mxu0 0.0
        %533 = vmatmul.mubr.f32.gmra.mrb[0].mxu0 %v413
        %v534 = vpop.f32.mrb[0].mxu0
        %v535 = vadd.f32 %v314, %v534
        %v536 = vpop.f32.mrb[0].mxu0
        %537 = vmatprep.mubr.f32.mxu0 0.0
        %538 = vmatmul.mubr.f32.gmra.mrb[0].mxu0 %v416
        %v539 = vpop.f32.mrb[0].mxu0
        %v540 = vadd.f32 %v315, %v539
        %v541 = vpop.f32.mrb[0].mxu0
        %542 = vmatprep.mubr.f32.mxu0 0.0
        %543 = vmatmul.mubr.f32.gmra.mrb[0].mxu0 %v419
        %v544 = vpop.f32.mrb[0].mxu0
        %v545 = vadd.f32 %v316, %v544
        %v546 = vpop.f32.mrb[0].mxu0
        %547 = vmatprep.mubr.f32.mxu0 0.0
        %548 = vmatmul.mubr.f32.gmra.mrb[0].mxu0 %v422
        %v549 = vpop.f32.mrb[0].mxu0
        %v550 = vadd.f32 %v317, %v549
        %v551 = vpop.f32.mrb[0].mxu0
        %552 = vmatprep.mubr.f32.mxu0 0.0
        %553 = vmatmul.mubr.f32.gmra.mrb[0].mxu0 %v425
        %v554 = vpop.f32.mrb[0].mxu0
        %v555 = vadd.f32 %v318, %v554
        %v556 = vpop.f32.mrb[0].mxu0
        %557 = vmatprep.mubr.f32.mxu0 0.0
        %558 = vmatmul.mubr.f32.gmra.mrb[0].mxu0 %v428
        %v559 = vpop.f32.mrb[0].mxu0
        %v560 = vadd.f32 %v319, %v559
        %v561 = vpop.f32.mrb[0].mxu0
        %562 = vmatprep.mubr.f32.mxu0 0.0
        %563 = vmatmul.mubr.f32.gmra.mrb[0].mxu0 %v431
        %v564 = vpop.f32.mrb[0].mxu0
        %v565 = vadd.f32 %v320, %v564
        %v566 = vpop.f32.mrb[0].mxu0
        %567 = vmatprep.mubr.f32.mxu0 0.0
        %568 = vmatmul.mubr.f32.gmra.mrb[0].mxu0 %v434
        %v569 = vpop.f32.mrb[0].mxu0
        %v570 = vadd.f32 %v321, %v569
        %v571 = vpop.f32.mrb[0].mxu0
        %572 = vmatprep.mubr.f32.mxu0 0.0
        %573 = vmatmul.mubr.f32.gmra.mrb[0].mxu0 %v437
        %v574 = vpop.f32.mrb[0].mxu0
        %v575 = vadd.f32 %v322, %v574
        %v576 = vpop.f32.mrb[0].mxu0
        %577 = vmatprep.mubr.f32.mxu0 0.0
        %578 = vmatmul.mubr.f32.gmra.mrb[0].mxu0 %v440
        %v579 = vpop.f32.mrb[0].mxu0
        %v580 = vadd.f32 %v323, %v579
        %v581 = vpop.f32.mrb[0].mxu0
        %582 = vmatprep.mubr.f32.mxu0 0.0
        %583 = vmatmul.mubr.f32.gmra.mrb[0].mxu0 %v443
        %v584 = vpop.f32.mrb[0].mxu0
        %v585 = vadd.f32 %v324, %v584
        %v586 = vpop.f32.mrb[0].mxu0
        %587 = vmatprep.mubr.f32.mxu0 0.0
        %588 = vmatmul.mubr.f32.gmra.mrb[0].mxu0 %v446
        %v589 = vpop.f32.mrb[0].mxu0
        %v590 = vadd.f32 %v325, %v589
        %v591 = vpop.f32.mrb[0].mxu0
        %592 = vdwg.mxu0
        %v593 = vmul.f32 %v368, %v515
        %v594 = vmul.f32 %v369, %v520
        %v595 = vmul.f32 %v370, %v525
        %v596 = vmul.f32 %v371, %v530
        %v597 = vmul.f32 %v372, %v535
        %v598 = vmul.f32 %v373, %v540
        %v599 = vmul.f32 %v374, %v545
        %v600 = vmul.f32 %v375, %v550
        %v601 = vmul.f32 %v376, %v555
        %v602 = vmul.f32 %v377, %v560
        %v603 = vmul.f32 %v378, %v565
        %v604 = vmul.f32 %v379, %v570
        %v605 = vmul.f32 %v380, %v575
        %v606 = vmul.f32 %v381, %v580
        %v607 = vmul.f32 %v382, %v585
        %v608 = vmul.f32 %v383, %v590
        %v609 = vlaneseq
        %v610 = vshrl.u32 %v609, 7
        %v611 = vsub.s32 0, %v610
        %v612 = vrot.slane %v330, %v611
        %v613 = vadd.f32 %v593, %v612
        %v614 = vadd.f32 %v594, %v612
        %v615 = vadd.f32 %v595, %v612
        %v616 = vadd.f32 %v596, %v612
        %v617 = vadd.f32 %v597, %v612
        %v618 = vadd.f32 %v598, %v612
        %v619 = vadd.f32 %v599, %v612
        %v620 = vadd.f32 %v600, %v612
        %v621 = vadd.f32 %v601, %v612
        %v622 = vadd.f32 %v602, %v612
        %v623 = vadd.f32 %v603, %v612
        %v624 = vadd.f32 %v604, %v612
        %v625 = vadd.f32 %v605, %v612
        %v626 = vadd.f32 %v606, %v612
        %v627 = vadd.f32 %v607, %v612
        %v628 = vadd.f32 %v608, %v612
        %629 = vst [vmem:[%s185] sm:$0xff] %v613
        %630 = vst [vmem:[%s185 + $0x8] sm:$0xff] %v614
        %631 = vst [vmem:[%s185 + $0x10] sm:$0xff] %v615
        %632 = vst [vmem:[%s185 + $0x18] sm:$0xff] %v616
        %633 = vst [vmem:[%s185 + $0x20] sm:$0xff] %v617
        %634 = vst [vmem:[%s185 + $0x28] sm:$0xff] %v618
        %635 = vst [vmem:[%s185 + $0x30] sm:$0xff] %v619
        %636 = vst [vmem:[%s185 + $0x38] sm:$0xff] %v620
        %637 = vst [vmem:[%s185 + $0x40] sm:$0xff] %v621
        %638 = vst [vmem:[%s185 + $0x48] sm:$0xff] %v622
        %639 = vst [vmem:[%s185 + $0x50] sm:$0xff] %v623
        %640 = vst [vmem:[%s185 + $0x58] sm:$0xff] %v624
        %641 = vst [vmem:[%s185 + $0x60] sm:$0xff] %v625
        %642 = vst [vmem:[%s185 + $0x68] sm:$0xff] %v626
        %643 = vst [vmem:[%s185 + $0x70] sm:$0xff] %v627
        %644 = vst [vmem:[%s185 + $0x78] sm:$0xff] %v628
        %s645 = sand.u32 %s105, 1
        %s646 = scalar_lea.sflag [#allocation6], %s645
        %s647 = sand.u32 %s105, 1
        %s648 = smul.addr %s647, 128
        %s649 = scalar_lea.vmem [#allocation5], %s648
        // Predicated region
        $region33: #{tpu_custom_call.1} parent=31 // pred_check
          %p650 = pneg %p115
        $region34: #{tpu_custom_call.1} parent=31 // pred_check_branch
          %652 = sbr.rel (%p650) target = $region36
        $region35: #{tpu_custom_call.1} parent=31 // pred_region
          %s654 = ssub.s32 2048, 2048
          %655 = vsyncadd %s646, %s654
          %s656 = smul.addr %s24, 16
          %s657 = smul.addr %s656, 128
          %s658 = scalar_lea.hbm %s4, %s657
          %s659 = sshll.u32 %s649, 4
          %s660 = int_to_ptr.vmem [resolvable:$true] %s659
          %665 = dma.vmem_to_hbm [thread:$0]  %s660, 2048, %s658, %s646, 128, 128, 8
        $region36: #{tpu_custom_call.1} parent=31 // pred_fallthru
          _
      $region32: #{tpu_custom_call.1} parent=5 // pred_fallthru
        _
      %p666 = scmp.le.s32.totalorder 2, %s19
      // Predicated region
      $region37: #{tpu_custom_call.1} parent=5 // pred_check
        %p667 = pneg %p666
      $region38: #{tpu_custom_call.1} parent=5 // pred_check_branch
        %669 = sbr.rel (%p667) target = $region40
      $region39: #{tpu_custom_call.1} parent=5 // pred_region
        %s670 = ssub.s32 %s19, 2
        // Predicated region
        $region41: #{tpu_custom_call.1} parent=39 // pred_check
          %p671 = pneg %p121
        $region42: #{tpu_custom_call.1} parent=39 // pred_check_branch
          %673 = sbr.rel (%p671) target = $region44
        $region43: #{tpu_custom_call.1} parent=39 // pred_region
          %s674 = sand.u32 %s106, 1
          %s675 = scalar_lea.sflag [#allocation6], %s674
          %s676 = sand.u32 %s106, 1
          %s677 = smul.addr %s676, 128
          %s678 = scalar_lea.vmem [#allocation5], %s677
          %679 = dma.done %s675, 2048
        $region44: #{tpu_custom_call.1} parent=39 // pred_fallthru
          _
      $region40: #{tpu_custom_call.1} parent=5 // pred_fallthru
        _
    $region6: #{tpu_custom_call.1} parent=1 // loop_footer
      %s23 = sadd.s32 1, %s19
    $region7: #{tpu_custom_call.1} parent=1 // loop_footer_branch
      %18 = sbr.rel target = $region3
    $region8: #{tpu_custom_call.1} parent=1 // loop_exit
      _
    %680 = vsyncpa [#allocation6], 1
    %s681 = scalar_lea.sflag [#allocation6], 1
    %682 = vsyncpa %s681, 1

</llo_original>
